<compile_context>
chip_gen: v7x
topology: tpu7x:2x2x1
jax: 0.10.0
libtpu: 0.0.40
codegen_flags: <defaults>
</compile_context>

<pallas_src>
import functools
import math

import numpy as np

import jax
import jax.numpy as jnp
from jax.experimental import pallas as pl
from jax.experimental.pallas import tpu as pltpu


# --------------------------------------------------------------------------
# Kernels
# --------------------------------------------------------------------------
def _pe_kernel(div_ref, phase_ref, o_ref):
    """General path. o_ref block: (TN, D); div/phase: (1, D) constants."""
    TN = o_ref.shape[0]
    tile = pl.program_id(0)
    # Global sequence position for each row of this tile, as a (TN, 1) column.
    row = jax.lax.broadcasted_iota(jnp.int32, (TN, 1), 0) + tile * TN
    pos = row.astype(jnp.float32)
    # One transcendental per element: sin(pos * div + phase); phase is pi/2 on
    # odd columns so that odd columns produce cos.
    o_ref[...] = jnp.sin(pos * div_ref[...] + phase_ref[...])


def _pe_kernel_packed(lane_off_ref, div_ref, phase_ref, o_ref, *, pos_per_row):
    """Lane-dense path (D < 128, 128 % D == 0). o_ref block: (TR, 128).

    Each 128-lane row packs `pos_per_row = 128 // D` consecutive positions.
    lane_off[lane] = lane // D, div/phase are the per-lane constants.
    """
    TR = o_ref.shape[0]
    tile = pl.program_id(0)
    row = jax.lax.broadcasted_iota(jnp.int32, (TR, 1), 0) + tile * TR
    pos = row.astype(jnp.float32) * float(pos_per_row) + lane_off_ref[...]
    o_ref[...] = jnp.sin(pos * div_ref[...] + phase_ref[...])


# --------------------------------------------------------------------------
# Wrapper
# --------------------------------------------------------------------------
def _pick_tile_rows(n_rows: int, row_width: int,
                    budget_bytes: int = 4 * 1024 * 1024) -> int:
    """Largest row-tile (multiple of 8, <= 2048) fitting the per-buffer budget.

    Output is only double-buffered, so VMEM cost is ~2 * tile * row_width * 4 B,
    comfortably below the v7x 32 MiB scoped default.
    """
    max_rows = budget_bytes // (row_width * 4)
    tr = min(2048, max_rows)
    tr = max(8, (tr // 8) * 8)
    if tr >= n_rows:
        return n_rows
    return tr


def _build_pe_table(N: int, D: int) -> jax.Array:
    """Build the [N, D] sinusoidal table with a Pallas kernel."""
    cols = np.arange(D)
    # div_full[col] = exp(2*(col//2) * (-ln(10000)/D)); phase = pi/2 on odd cols.
    div_full = np.exp((cols - (cols % 2)) * (-math.log(10000.0) / D)).astype(np.float32)
    phase = ((cols % 2) * (math.pi / 2.0)).astype(np.float32)

    use_packed = (D < 128) and (128 % D == 0) and ((N * D) % 128 == 0)

    if use_packed:
        R = (N * D) // 128           # lane-dense rows
        r = 128 // D                 # positions packed per 128-lane row
        lane = np.arange(128)
        col = lane % D
        lane_off = (lane // D).astype(np.float32)
        div128 = div_full[col]
        phase128 = phase[col]

        TR = _pick_tile_rows(R, 128)
        grid = (pl.cdiv(R, TR),)

        out = pl.pallas_call(
            functools.partial(_pe_kernel_packed, pos_per_row=r),
            out_shape=jax.ShapeDtypeStruct((R, 128), jnp.float32),
            grid=grid,
            in_specs=[
                pl.BlockSpec((1, 128), lambda i: (0, 0)),
                pl.BlockSpec((1, 128), lambda i: (0, 0)),
                pl.BlockSpec((1, 128), lambda i: (0, 0)),
            ],
            out_specs=pl.BlockSpec((TR, 128), lambda i: (i, 0)),
            compiler_params=pltpu.CompilerParams(
                dimension_semantics=("parallel",)
            ),
        )(
            jnp.asarray(lane_off)[None, :],
            jnp.asarray(div128)[None, :],
            jnp.asarray(phase128)[None, :],
        )
        return out.reshape(N, D)

    # General path: D is a multiple of 128 (or awkward) -> tile rows directly.
    TN = _pick_tile_rows(N, D)
    grid = (pl.cdiv(N, TN),)

    return pl.pallas_call(
        _pe_kernel,
        out_shape=jax.ShapeDtypeStruct((N, D), jnp.float32),
        grid=grid,
        in_specs=[
            pl.BlockSpec((1, D), lambda i: (0, 0)),
            pl.BlockSpec((1, D), lambda i: (0, 0)),
        ],
        out_specs=pl.BlockSpec((TN, D), lambda i: (i, 0)),
        compiler_params=pltpu.CompilerParams(
            dimension_semantics=("parallel",)
        ),
    )(jnp.asarray(div_full)[None, :], jnp.asarray(phase)[None, :])


def sinusoidal_positional_encoding(x: jax.Array) -> jax.Array:
    """Mirrors SinusoidalPositionalEncoding.forward: returns [B, N, D] f32."""
    B, N, D = x.shape
    assert D % 2 == 0, "embed_dim must be even (same constraint as PyTorch code)"
    pe = _build_pe_table(N, D)                       # [N, D]
    return jnp.broadcast_to(pe[None, :, :], (B, N, D))


# --------------------------------------------------------------------------
# Pure-JAX reference (matches the PyTorch buffer construction)
# --------------------------------------------------------------------------
def _reference(x: jax.Array) -> jax.Array:
    B, N, D = x.shape
    position = jnp.arange(N, dtype=jnp.float32)[:, None]
    div_term = jnp.exp(
        jnp.arange(0, D, 2, dtype=jnp.float32) * (-math.log(10000.0) / D)
    )
    pe = jnp.zeros((N, D), jnp.float32)
    pe = pe.at[:, 0::2].set(jnp.sin(position * div_term))
    pe = pe.at[:, 1::2].set(jnp.cos(position * div_term))
    return jnp.broadcast_to(pe[None], (B, N, D))


if __name__ == "__main__":
    key = jax.random.PRNGKey(0)

    # Small shape consistent with the module: [batch, num_patches, embed_dim].
    B, N, D = 2, 8, 32
    x = jax.random.normal(key, (B, N, D), dtype=jnp.float32)

    out = jax.block_until_ready(sinusoidal_positional_encoding(x))
    ref = _reference(x)
    assert out.shape == (B, N, D)
    assert out.dtype == jnp.float32
    assert jnp.allclose(out, ref, atol=1e-5, rtol=1e-5)

    # Also exercise the general path (wide D, non-divisible tail along N).
    B2, N2, D2 = 2, 200, 256
    x2 = jax.random.normal(key, (B2, N2, D2), dtype=jnp.float32)
    out2 = jax.block_until_ready(sinusoidal_positional_encoding(x2))
    ref2 = _reference(x2)
    assert jnp.allclose(out2, ref2, atol=1e-4, rtol=1e-5)

    print("KERNEL_OK")
</pallas_src>

<mosaic_0001>
module attributes {stable_mosaic.version = 11 : i64} {
  func.func @_pe_kernel_packed(%arg0: i32, %arg1: memref<1x128xf32, #tpu.memory_space<vmem>>, %arg2: memref<1x128xf32, #tpu.memory_space<vmem>>, %arg3: memref<1x128xf32, #tpu.memory_space<vmem>>, %arg4: memref<2x128xf32, #tpu.memory_space<vmem>>) attributes {dimension_semantics = [#tpu.dimension_semantics<parallel>], iteration_bounds = array<i64: 1>, scalar_prefetch = 0 : i64, scratch_operands = 0 : i64, tpu.core_type = #tpu.core_type<tc>, window_params = [{pipeline_mode = #tpu.pipeline_mode<synchronous>, transform_indices = @transform_0, window_bounds = array<i64: 1, 128>}, {pipeline_mode = #tpu.pipeline_mode<synchronous>, transform_indices = @transform_1, window_bounds = array<i64: 1, 128>}, {pipeline_mode = #tpu.pipeline_mode<synchronous>, transform_indices = @transform_2, window_bounds = array<i64: 1, 128>}, {transform_indices = @transform_3, window_bounds = array<i64: 2, 128>}]} {
    %0 = tpu.iota {dimensions = array<i32: 0>} : vector<2x1xi32>
    %c2_i32 = arith.constant 2 : i32
    %1 = arith.muli %arg0, %c2_i32 : i32
    %2 = vector.broadcast %1 : i32 to vector<2x1xi32>
    %3 = arith.addi %0, %2 : vector<2x1xi32>
    %4 = arith.sitofp %3 : vector<2x1xi32> to vector<2x1xf32>
    %cst = arith.constant 4.000000e+00 : f32
    %5 = vector.broadcast %cst : f32 to vector<2x1xf32>
    %6 = arith.mulf %4, %5 : vector<2x1xf32>
    %c0 = arith.constant 0 : index
    %c0_0 = arith.constant 0 : index
    %7 = vector.load %arg1[%c0, %c0_0] : memref<1x128xf32, #tpu.memory_space<vmem>>, vector<1x128xf32>
    %8 = vector.broadcast %6 : vector<2x1xf32> to vector<2x128xf32>
    %9 = vector.broadcast %7 : vector<1x128xf32> to vector<2x128xf32>
    %10 = arith.addf %8, %9 : vector<2x128xf32>
    %c0_1 = arith.constant 0 : index
    %c0_2 = arith.constant 0 : index
    %11 = vector.load %arg2[%c0_1, %c0_2] : memref<1x128xf32, #tpu.memory_space<vmem>>, vector<1x128xf32>
    %12 = vector.broadcast %11 : vector<1x128xf32> to vector<2x128xf32>
    %13 = arith.mulf %10, %12 : vector<2x128xf32>
    %c0_3 = arith.constant 0 : index
    %c0_4 = arith.constant 0 : index
    %14 = vector.load %arg3[%c0_3, %c0_4] : memref<1x128xf32, #tpu.memory_space<vmem>>, vector<1x128xf32>
    %15 = vector.broadcast %14 : vector<1x128xf32> to vector<2x128xf32>
    %16 = arith.addf %13, %15 : vector<2x128xf32>
    %17 = math.sin %16 : vector<2x128xf32>
    %c0_5 = arith.constant 0 : index
    %c0_6 = arith.constant 0 : index
    %18 = vector.load %arg4[%c0_5, %c0_6] : memref<2x128xf32, #tpu.memory_space<vmem>>, vector<2x128xf32>
    tpu.vector_store %arg4[%c0_5, %c0_6], %17 {strides = array<i32>} : memref<2x128xf32, #tpu.memory_space<vmem>>, vector<2x128xf32>,
    return
  }
  func.func @transform_0(%arg0: i32) -> (i32, i32) {
    %c0_i32 = arith.constant 0 : i32
    %c0_i32_0 = arith.constant 0 : i32
    %c0_i32_1 = arith.constant 0 : i32
    return %c0_i32, %c0_i32_0 : i32, i32
  }
  func.func @transform_1(%arg0: i32) -> (i32, i32) {
    %c0_i32 = arith.constant 0 : i32
    %c0_i32_0 = arith.constant 0 : i32
    %c0_i32_1 = arith.constant 0 : i32
    return %c0_i32, %c0_i32_0 : i32, i32
  }
  func.func @transform_2(%arg0: i32) -> (i32, i32) {
    %c0_i32 = arith.constant 0 : i32
    %c0_i32_0 = arith.constant 0 : i32
    %c0_i32_1 = arith.constant 0 : i32
    return %c0_i32, %c0_i32_0 : i32, i32
  }
  func.func @transform_3(%arg0: i32) -> (i32, i32) {
    %c0_i32 = arith.constant 0 : i32
    %c0_i32_0 = arith.constant 0 : i32
    return %arg0, %c0_i32 : i32, i32
  }
}

</mosaic_0001>

<llo_original>
// kernel: tpu_custom_call.1
$region0: #{tpu_custom_call.1}
  #allocation0 [shape = 'u32[]', space=smem, size = 0x4, offset = 0x4, fixed_abs, tag = 'smem constant byte address 0x4 - core index']
  #allocation1 [shape = 'u32[144,128]{1,0:T(1,128)}', space=vmem, size = 0x12000, scoped, tag = 'internal scratch']
  %s0 = inlined_call_operand.hbm [shape: f32[1,128], index: 0, kind: input, shape index: {}]
  %s1 = inlined_call_operand.vmem [shape: f32[1,128], index: 1, kind: input, shape index: {}]
  %s2 = inlined_call_operand.vmem [shape: f32[1,128], index: 2, kind: input, shape index: {}]
  %s3 = inlined_call_operand.hbm [shape: f32[2,128], index: 3, kind: output, shape index: {}]
  %s4 = sld [smem:[#allocation0]]
  $region26: #{tpu_custom_call.1} parent=0
    _
  %s6 = ssub.s32 1, %s4
  %s7 = scalar_select 0, %s6, %s4
  $region1: #{tpu_custom_call.1} parent=0
    #allocation2 [shape = 'u8[512]{0}', space=vmem, size = 0x400, scoped, tag = 'input window, operand 0, single buffered']
    #allocation3 [shape = 's32[1]{0}', space=sflag, size = 0x4, scoped, tag = 'scoped memory for tpu_custom_call.1']
    #allocation4 [shape = 's32[1]{0}', space=sflag, size = 0x4, scoped, tag = 'scoped memory for tpu_custom_call.1']
    #allocation5 [shape = 'u8[1024]{0}', space=vmem, size = 0x400, scoped, tag = 'output window, operand 0, single buffered']
    %8 = vsyncpa [#allocation3], 0
    %9 = vsyncpa [#allocation4], 0
    // Predicated region
    $region2: #{tpu_custom_call.1} parent=1 // pred_check
      _
    $region3: #{tpu_custom_call.1} parent=1 // pred_check_branch
      %11 = sbr.rel (0) target = $region5
    $region4: #{tpu_custom_call.1} parent=1 // pred_region
      %s13 = ssub.s32 16, 16
      %14 = vsyncadd [#allocation3], %s13
      %s16 = sshll.u32 [#allocation2], 4
      %s17 = int_to_ptr.vmem [resolvable:$true] %s16
      %19 = dma.hbm_to_vmem [thread:$0]  %s0, 16, %s17, [#allocation3]
    $region5: #{tpu_custom_call.1} parent=1 // pred_fallthru
      _
    // Predicated region
    $region6: #{tpu_custom_call.1} parent=1 // pred_check
      _
    $region7: #{tpu_custom_call.1} parent=1 // pred_check_branch
      %21 = sbr.rel (0) target = $region9
    $region8: #{tpu_custom_call.1} parent=1 // pred_region
      _
    $region9: #{tpu_custom_call.1} parent=1 // pred_fallthru
      _
    // Predicated region
    $region10: #{tpu_custom_call.1} parent=1 // pred_check
      _
    $region11: #{tpu_custom_call.1} parent=1 // pred_check_branch
      %23 = sbr.rel (0) target = $region13
    $region12: #{tpu_custom_call.1} parent=1 // pred_region
      _
    $region13: #{tpu_custom_call.1} parent=1 // pred_fallthru
      _
    // Predicated region
    $region14: #{tpu_custom_call.1} parent=1 // pred_check
      _
    $region15: #{tpu_custom_call.1} parent=1 // pred_check_branch
      %25 = sbr.rel (0) target = $region17
    $region16: #{tpu_custom_call.1} parent=1 // pred_region
      %26 = dma.done [#allocation3], 16
    $region17: #{tpu_custom_call.1} parent=1 // pred_fallthru
      _
    %v27 = vlaneseq
    %v28 = vshrl.u32 %v27, 7
    %s29 = smul.u32 0, 2
    %v30 = vstv %s29
    %v31 = vadd.s32 %v28, %v30
    %v32 = vcvt.s32.f32 %v31
    %v33 = vmul.f32 %v32, 4.0
    %v34 = vld [vmem:[#allocation2] sm:$0x1]
    %v36 = vlaneseq
    %v37 = vshrl.u32 %v36, 7
    %v38 = vsub.s32 0, %v37
    %v39 = vrot.slane %v34, %v38
    %v41 = vadd.f32 %v33, %v39
    %v42 = vld [vmem:[%s1] sm:$0x1]
    %v44 = vlaneseq
    %v45 = vshrl.u32 %v44, 7
    %v46 = vsub.s32 0, %v45
    %v47 = vrot.slane %v42, %v46
    %v49 = vmul.f32 %v41, %v47
    %v50 = vld [vmem:[%s2] sm:$0x1]
    %v52 = vlaneseq
    %v53 = vshrl.u32 %v52, 7
    %v54 = vsub.s32 0, %v53
    %v55 = vrot.slane %v50, %v54
    %v57 = vadd.f32 %v49, %v55
    %v58 = vand.u32 2147483647, %v57
    %vm59 = vcmp.le.f32.partialorder %v58, 0.7853982
    %vm60 = vcmp.lt.s32.totalorder %v57, 0
    %v61 = vand.u32 %v57, 2139095040
    %v62 = vshrl.u32 %v61, 23
    %v63 = vsub.s32 %v62, 127
    %v64 = vand.u32 2147483647, %v57
    %v65 = vand.u32 %v64, 8388607
    %v66 = vor.u32 %v65, 8388608
    %v67 = vsub.s32 0, %v66
    %v68 = vadd.s32 %v63, 1
    %vm69 = vcmp.gt.s32.totalorder %v68, 0
    %v70 = vsel %vm69, %v68, 0
    %v71 = vshrl.u32 %v70, 5
    %v72 = vand.u32 %v70, 31
    %v73 = vsub.s32 32, %v72
    %v74 = vshrl.u32 683565275, %v73
    %v75 = vshll.u32 683565275, %v72
    %v76 = vshrl.u32 2475754826, %v73
    %v77 = vor.u32 %v75, %v76
    %v78 = vshll.u32 2475754826, %v72
    %v79 = vshrl.u32 2131351028, %v73
    %v80 = vor.u32 %v78, %v79
    %v81 = vshll.u32 2131351028, %v72
    %v82 = vshrl.u32 2102212464, %v73
    %v83 = vor.u32 %v81, %v82
    %v84 = vshll.u32 2102212464, %v72
    %v85 = vshrl.u32 920167782, %v73
    %v86 = vor.u32 %v84, %v85
    %v87 = vshll.u32 920167782, %v72
    %v88 = vshrl.u32 1326507024, %v73
    %v89 = vor.u32 %v87, %v88
    %vm90 = vcmp.lt.s32.totalorder %v71, 1
    %vm91 = vcmp.lt.s32.totalorder %v71, 2
    %vm92 = vcmp.lt.s32.totalorder %v71, 3
    %vm93 = vcmp.lt.s32.totalorder %v71, 4
    %v94 = vsel %vm90, %v74, %v77
    %v95 = vsel %vm93, %v83, 2102212464
    %v96 = vsel %vm92, %v80, %v95
    %v97 = vsel %vm91, %v94, %v96
    %v98 = vsel %vm90, %v77, %v80
    %v99 = vsel %vm93, %v86, 920167782
    %v100 = vsel %vm92, %v83, %v99
    %v101 = vsel %vm91, %v98, %v100
    %v102 = vsel %vm90, %v80, %v83
    %v103 = vsel %vm93, %v89, 1326507024
    %v104 = vsel %vm92, %v86, %v103
    %v105 = vsel %vm91, %v102, %v104
    %v106 = vshll.u32 %v66, 8
    %v107 = vmul.u32.u64.compose %v106, %v105
    %v108 = vextract.low.u32 %v107
    %v109 = vextract.high.u32 %v107
    %v110 = vmul.u32.u64.compose %v106, %v101
    %v111 = vextract.low.u32 %v110
    %v112 = vextract.high.u32 %v110
    %v113 = vmul.u32 %v106, %v97
    %v114 = vadd.s32 %v109, %v111
    %vm115 = vc.u32 %v109, %v111
    %v116 = vadd.s32 %v112, 1
    %v117 = vsel %vm115, %v116, %v112
    %v118 = vadd.s32 %v113, %v117
    %v119 = vadd.s32 %v118, 536870912
    %v120 = vshrl.u32 %v119, 30
    %v121 = vshll.u32 %v120, 30
    %v122 = vsub.s32 %v118, %v121
    %vm123 = vcmp.lt.s32.totalorder %v122, 0
    %v124 = vsub.s32 0, %v122
    %v125 = vsel %vm123, %v124, %v122
    %v126 = vclz %v125
    %v127 = vsub.s32 %v126, 2
    %vm128 = vcmp.gt.s32.totalorder 0, %v127
    %v129 = vsel %vm128, 0, %v127
    %v130 = vsub.s32 32, %v129
    %v131 = vshll.u32 %v122, %v129
    %v132 = vshrl.u32 %v114, %v130
    %v133 = vor.u32 %v131, %v132
    %v134 = vsub.s32 4294967266, %v129
    %v135 = vadd.s32 %v134, 127
    %v136 = vshll.u32 %v135, 23
    %v137 = vor.u32 4788187, %v136
    %v138 = vand.u32 2147483647, %v137
    %v140 = vcvt.s32.f32 %v133
    %v141 = vmul.f32 %v140, %v138
    %v142 = vxor.u32 %v141, 2147483648
    %v143 = vsel %vm60, %v142, %v141
    %v144 = vsub.s32 4, %v120
    %v145 = vsel %vm60, %v144, %v120
    %v146 = vsel %vm59, %v57, %v143
    %v147 = vsel %vm59, 0, %v145
    %v148 = vcosq.f32.pop %v146
    %v149 = vsinq.f32.pop %v146
    %vm150 = vweird.f32 %v57
    %v151 = vadd.s32 %v147, 3
    %v152 = vand.u32 %v151, 3
    %vm153 = vcmp.lt.s32.totalorder %v152, 2
    %vm154 = vcmp.eq.s32.totalorder %v152, 0
    %v155 = vxor.u32 %v149, 2147483648
    %v156 = vsel %vm154, %v148, %v155
    %vm157 = vcmp.eq.s32.totalorder %v152, 2
    %v158 = vxor.u32 %v148, 2147483648
    %v159 = vsel %vm157, %v158, %v149
    %v160 = vsel %vm153, %v156, %v159
    %v161 = vsel %vm150, nan, %v160
    %162 = vst [vmem:[#allocation5] sm:$0x3] %v161
    // Predicated region
    $region18: #{tpu_custom_call.1} parent=1 // pred_check
      _
    $region19: #{tpu_custom_call.1} parent=1 // pred_check_branch
      %164 = sbr.rel (0) target = $region21
    $region20: #{tpu_custom_call.1} parent=1 // pred_region
      %s166 = ssub.s32 32, 32
      %167 = vsyncadd [#allocation4], %s166
      %s169 = sshll.u32 [#allocation5], 4
      %s170 = int_to_ptr.vmem [resolvable:$true] %s169
      %172 = dma.vmem_to_hbm [thread:$0]  %s170, 32, %s3, [#allocation4]
    $region21: #{tpu_custom_call.1} parent=1 // pred_fallthru
      _
    // Predicated region
    $region22: #{tpu_custom_call.1} parent=1 // pred_check
      _
    $region23: #{tpu_custom_call.1} parent=1 // pred_check_branch
      %174 = sbr.rel (0) target = $region25
    $region24: #{tpu_custom_call.1} parent=1 // pred_region
      %175 = dma.done [#allocation4], 32
    $region25: #{tpu_custom_call.1} parent=1 // pred_fallthru
      _
    %176 = vsyncpa [#allocation3], 1
    %177 = vsyncpa [#allocation4], 1

</llo_original>
